<compile_context>
chip_gen: v7x
topology: tpu7x:2x2x1
jax: 0.10.0
libtpu: 0.0.40
codegen_flags: <defaults>
</compile_context>

<pallas_src>
import functools

import jax
import jax.numpy as jnp
from jax.experimental import pallas as pl
from jax.experimental.pallas import tpu as pltpu

LANE = 128          # fused hidden width (2*64) and fused logits width
HIDDEN = 64
OUT_ROWS = 16       # sublane rows of the transposed output slab (>= A+1, mult of 8)
BIAS_ROWS = 8       # bias slab rows (3 biases + 1 mask + padding to 8 sublanes)


def _round_up(x, m):
    return pl.cdiv(x, m) * m


@functools.lru_cache(maxsize=1)
def _num_tensorcores():
    try:
        return max(1, int(getattr(jax.devices()[0], "num_cores", 1)))
    except Exception:
        return 1


def _choose_tile(batch, block_b, num_cores):
    """Pick a 128-aligned batch tile; ensure grid >= num_cores when worthwhile."""
    b_ceil = _round_up(max(batch, 1), 128)
    tb_max = max(128, _round_up(min(block_b, b_ceil), 128))
    n_tiles = pl.cdiv(b_ceil, tb_max)
    if num_cores > 1 and b_ceil >= 128 * num_cores:
        n_tiles = _round_up(n_tiles, num_cores)
    tb = max(128, _round_up(pl.cdiv(b_ceil, n_tiles), 128))
    b_pad = _round_up(b_ceil, tb)
    return tb, b_pad


# ----------------------------------------------------------------------------
# Kernel: one batch tile [TB, S] -> one transposed output tile [16, TB]
#   sublanes [0, A)  : log-softmax of actor logits
#   sublane  A       : critic state value
#   sublanes > A     : zeros (padding)
# ----------------------------------------------------------------------------
def fused_actor_critic_kernel(s_ref, w1_ref, w23_ref, b_ref, out_ref):
    f32 = jnp.float32
    cdt = w1_ref.dtype                       # compute dtype = packed weight dtype

    x = s_ref[...]                           # [TB, S] f32 (streamed)
    if cdt != jnp.float32:
        x = x.astype(cdt)                    # MXU-operand-only cast
    w1 = w1_ref[...]                         # [S, 128]   (VMEM-resident)
    w2 = w23_ref[0]                          # [128, 128] block-diag(aw2, cw2)
    w3 = w23_ref[1]                          # [128, 128] aw3 | cw3 | zeros

    # layer 1 (both towers at once): [TB,128], f32 accumulation
    h = jnp.dot(x, w1, preferred_element_type=f32) + b_ref[0:1, :]
    h = jnp.maximum(h, 0.0)
    if cdt != jnp.float32:
        h = h.astype(cdt)

    # layer 2 (block-diagonal): [TB,128]
    h = jnp.dot(h, w2, preferred_element_type=f32) + b_ref[1:2, :]
    h = jnp.maximum(h, 0.0)
    if cdt != jnp.float32:
        h = h.astype(cdt)

    # layer 3: actor logits in lanes [0,A), critic value in lane A, 0 elsewhere
    z = jnp.dot(h, w3, preferred_element_type=f32) + b_ref[2:3, :]

    # masked log-softmax over the actor lanes only (mask precomputed host-side)
    is_actor = b_ref[3:4, :] > 0.5                       # [1,128] bool
    masked = jnp.where(is_actor, z, -jnp.inf)
    m = jnp.max(masked, axis=-1, keepdims=True)
    e = jnp.exp(masked - m)                              # exp(-inf)=0 on pad lanes
    lse = m + jnp.log(jnp.sum(e, axis=-1, keepdims=True))
    logp = z - lse

    fused = jnp.where(is_actor, logp, z)                 # [TB,128] logp | value | 0

    # Transpose (aligned [TB,128] -> [128,TB], XLU has slack) and keep only the
    # 16 payload sublanes -> lane-dense, unmasked store, 8x fewer HBM bytes.
    out_ref[...] = jnp.transpose(fused)[:OUT_ROWS, :]


# ----------------------------------------------------------------------------
# Raw forward: returns the [16, B_pad] transposed slab (single pallas_call)
# ----------------------------------------------------------------------------
def _forward_slab(state, packed, *, block_b):
    B, S = state.shape
    lane = packed["w1"].shape[-1]

    tb, b_pad = _choose_tile(B, block_b, _num_tensorcores())
    if b_pad != B:
        state = jnp.pad(state, ((0, b_pad - B), (0, 0)))
    grid = (b_pad // tb,)

    return pl.pallas_call(
        fused_actor_critic_kernel,
        out_shape=jax.ShapeDtypeStruct((OUT_ROWS, b_pad), jnp.float32),
        grid=grid,
        in_specs=[
            pl.BlockSpec((tb, S), lambda i: (i, 0)),               # streamed batch
            pl.BlockSpec((S, lane), lambda i: (0, 0)),             # VMEM-resident
            pl.BlockSpec((2, lane, lane), lambda i: (0, 0, 0)),    # VMEM-resident
            pl.BlockSpec((BIAS_ROWS, lane), lambda i: (0, 0)),     # biases + mask
        ],
        out_specs=pl.BlockSpec((OUT_ROWS, tb), lambda i: (0, i)),  # transposed slab
        compiler_params=pltpu.CompilerParams(
            dimension_semantics=("parallel",)),
    )(state, packed["w1"], packed["w23"], packed["b"])


# ----------------------------------------------------------------------------
# Convenience forward matching the PyTorch towers: (log_probs [B,A], value [B,1])
# ----------------------------------------------------------------------------
@functools.partial(jax.jit, static_argnames=("action_dim", "block_b"))
def actor_critic_forward(state, packed, *, action_dim, block_b=1024):
    slab = _forward_slab(state, packed, block_b=block_b)
    B = state.shape[0]
    pay = slab[:action_dim + 1, :B]              # one slice; split at consumer
    log_probs = pay[:action_dim].T               # [B, A]
    value = pay[action_dim:].T                   # [B, 1]
    return log_probs, value


# ----------------------------------------------------------------------------
# Parameter construction (PyTorch nn.Linear default init: U(+-1/sqrt(fan_in)))
# and one-time packing into the fused 128-lane slabs the kernel consumes.
# ----------------------------------------------------------------------------
def _linear_params(key, fan_in, fan_out):
    bound = 1.0 / jnp.sqrt(jnp.float32(fan_in))
    kw, kb = jax.random.split(key)
    w = jax.random.uniform(kw, (fan_in, fan_out), jnp.float32, -bound, bound)
    b = jax.random.uniform(kb, (1, fan_out), jnp.float32, -bound, bound)
    return w, b


def make_actor_critic_params(key, state_dim, action_dim, hidden=HIDDEN):
    keys = jax.random.split(key, 6)
    aw1, ab1 = _linear_params(keys[0], state_dim, hidden)
    aw2, ab2 = _linear_params(keys[1], hidden, hidden)
    aw3, ab3 = _linear_params(keys[2], hidden, action_dim)
    cw1, cb1 = _linear_params(keys[3], state_dim, hidden)
    cw2, cb2 = _linear_params(keys[4], hidden, hidden)
    cw3, cb3 = _linear_params(keys[5], hidden, 1)
    return dict(aw1=aw1, ab1=ab1, aw2=aw2, ab2=ab2, aw3=aw3, ab3=ab3,
                cw1=cw1, cb1=cb1, cw2=cw2, cb2=cb2, cw3=cw3, cb3=cb3)


def pack_actor_critic_params(p, state_dim, action_dim, hidden=HIDDEN,
                             lane=LANE, dtype=jnp.float32):
    assert 2 * hidden <= lane, "fused hidden must fit one 128-lane register row"
    assert action_dim + 1 <= OUT_ROWS, "fused output must fit the 16-row slab"
    h2 = 2 * hidden

    w1 = jnp.zeros((state_dim, lane), jnp.float32)
    w1 = w1.at[:, :hidden].set(p["aw1"]).at[:, hidden:h2].set(p["cw1"])

    w2 = jnp.zeros((lane, lane), jnp.float32)
    w2 = w2.at[:hidden, :hidden].set(p["aw2"])
    w2 = w2.at[hidden:h2, hidden:h2].set(p["cw2"])

    w3 = jnp.zeros((lane, lane), jnp.float32)
    w3 = w3.at[:hidden, :action_dim].set(p["aw3"])
    w3 = w3.at[hidden:h2, action_dim:action_dim + 1].set(p["cw3"])

    # Bias slab (always f32): rows 0..2 = layer biases, row 3 = actor-lane mask.
    b = jnp.zeros((BIAS_ROWS, lane), jnp.float32)
    b = b.at[0, :hidden].set(p["ab1"][0]).at[0, hidden:h2].set(p["cb1"][0])
    b = b.at[1, :hidden].set(p["ab2"][0]).at[1, hidden:h2].set(p["cb2"][0])
    b = b.at[2, :action_dim].set(p["ab3"][0])
    b = b.at[2, action_dim:action_dim + 1].set(p["cb3"][0])
    b = b.at[3, :action_dim].set(1.0)                      # hoisted actor mask

    return {"w1": w1.astype(dtype),                         # bf16 option: halves
            "w23": jnp.stack([w2, w3]).astype(dtype),       # weight DMA + MXU cost
            "b": b}


# ----------------------------------------------------------------------------
# PyTorch-equivalent `act` / `evaluate`, consuming the transposed slab directly
# (no extra HBM round-trip for the value column, no wrapper transposes).
# ----------------------------------------------------------------------------
# TODO(synk): fold Gumbel-max sampling / log-prob gather / entropy into the
# kernel epilogue (pltpu.prng_seed + prng_random_bits) so act()/evaluate() are
# a single pallas_call on the small-B rollout path.
@functools.partial(jax.jit, static_argnames=("action_dim", "block_b"))
def act(state, packed, key, *, action_dim, block_b=1024):
    slab = _forward_slab(state, packed, block_b=block_b)
    B = state.shape[0]
    logp = slab[:action_dim, :B]                              # [A, B]
    value = slab[action_dim, :B][:, None]                     # [B, 1]
    action = jax.random.categorical(key, logp, axis=0)        # [B]
    action_logprob = jnp.take_along_axis(logp, action[None, :], axis=0)[0]
    return action, action_logprob, value


@functools.partial(jax.jit, static_argnames=("action_dim", "block_b"))
def evaluate(state, action, packed, *, action_dim, block_b=1024):
    slab = _forward_slab(state, packed, block_b=block_b)
    B = state.shape[0]
    logp = slab[:action_dim, :B]                              # [A, B]
    value = slab[action_dim, :B][:, None]                     # [B, 1]
    action_logprobs = jnp.take_along_axis(
        logp, action[None, :].astype(jnp.int32), axis=0)[0]
    probs = jnp.exp(logp)
    dist_entropy = -jnp.sum(probs * logp, axis=0)
    return action_logprobs, value, dist_entropy


if __name__ == "__main__":
    B, STATE_DIM, ACTION_DIM = 24, 16, 8
    B2 = 300                                   # exercises the multi-tile grid path

    root = jax.random.PRNGKey(0)
    k_params, k_state, k_state2, k_sample = jax.random.split(root, 4)

    params = make_actor_critic_params(k_params, STATE_DIM, ACTION_DIM)
    packed = pack_actor_critic_params(params, STATE_DIM, ACTION_DIM)
    packed_bf16 = pack_actor_critic_params(params, STATE_DIM, ACTION_DIM,
                                           dtype=jnp.bfloat16)
    state = jax.random.normal(k_state, (B, STATE_DIM), jnp.float32)
    state2 = jax.random.normal(k_state2, (B2, STATE_DIM), jnp.float32)

    # Kernel forward: single-tile (grid=1) and multi-tile (grid>=2) paths.
    logp, value = actor_critic_forward(state, packed, action_dim=ACTION_DIM)
    logp2, value2 = actor_critic_forward(state2, packed, action_dim=ACTION_DIM,
                                         block_b=128)
    # bf16 MXU-operand path (f32 accumulation / activations).
    logp_bf, value_bf = actor_critic_forward(state, packed_bf16,
                                             action_dim=ACTION_DIM)
    jax.block_until_ready((logp, value, logp2, value2, logp_bf, value_bf))

    # act() / evaluate() paths (use the kernel internally, transposed layout).
    action, action_logprob, state_val = act(state, packed, k_sample,
                                            action_dim=ACTION_DIM)
    alp, sv, ent = evaluate(state, action, packed, action_dim=ACTION_DIM)
    jax.block_until_ready((action, action_logprob, state_val, alp, sv, ent))

    # Pure-JAX reference (identical math to the PyTorch module).
    def ref_forward(x, p):
        h = jax.nn.relu(x @ p["aw1"] + p["ab1"])
        h = jax.nn.relu(h @ p["aw2"] + p["ab2"])
        logits = h @ p["aw3"] + p["ab3"]
        pr = jax.nn.softmax(logits, axis=-1)
        lp = jax.nn.log_softmax(logits, axis=-1)
        c = jax.nn.relu(x @ p["cw1"] + p["cb1"])
        c = jax.nn.relu(c @ p["cw2"] + p["cb2"])
        v = c @ p["cw3"] + p["cb3"]
        return pr, lp, v

    ref_probs, ref_logp, ref_value = ref_forward(state, params)
    ref_probs2, ref_logp2, ref_value2 = ref_forward(state2, params)
    probs = jnp.exp(logp)

    assert jnp.allclose(logp, ref_logp, atol=1e-5), "actor log-probs mismatch"
    assert jnp.allclose(probs, ref_probs, atol=1e-5), "actor probs mismatch"
    assert jnp.allclose(value, ref_value, atol=1e-5), "critic value mismatch"
    assert jnp.allclose(logp2, ref_logp2, atol=1e-5), "tiled-grid logp mismatch"
    assert jnp.allclose(value2, ref_value2, atol=1e-5), "tiled-grid value mismatch"
    assert jnp.allclose(jnp.exp(logp_bf), ref_probs, atol=1e-1), "bf16 probs off"
    assert jnp.allclose(value_bf, ref_value, atol=1e-1), "bf16 value off"
    assert bool(jnp.all(jnp.abs(jnp.sum(probs, axis=-1) - 1.0) < 1e-5))
    assert probs.shape == (B, ACTION_DIM) and value.shape == (B, 1)
    assert logp2.shape == (B2, ACTION_DIM) and value2.shape == (B2, 1)
    assert action.shape == (B,) and action_logprob.shape == (B,)
    assert sv.shape == (B, 1) and ent.shape == (B,)
    # act's gathered log-prob must agree with the forward log-probs.
    assert jnp.allclose(
        action_logprob,
        jnp.take_along_axis(ref_logp, action[:, None], axis=-1)[:, 0],
        atol=1e-5)

    print("KERNEL_OK")
</pallas_src>

<mosaic_0001>
module attributes {stable_mosaic.version = 11 : i64} {
  func.func @fused_actor_critic_kernel(%arg0: i32, %arg1: memref<128x16xf32, #tpu.memory_space<vmem>>, %arg2: memref<16x128xf32, #tpu.memory_space<vmem>>, %arg3: memref<2x128x128xf32, #tpu.memory_space<vmem>>, %arg4: memref<8x128xf32, #tpu.memory_space<vmem>>, %arg5: memref<16x128xf32, #tpu.memory_space<vmem>>) attributes {dimension_semantics = [#tpu.dimension_semantics<parallel>], iteration_bounds = array<i64: 1>, scalar_prefetch = 0 : i64, scratch_operands = 0 : i64, tpu.core_type = #tpu.core_type<tc>, window_params = [{transform_indices = @transform_0, window_bounds = array<i64: 128, 16>}, {pipeline_mode = #tpu.pipeline_mode<synchronous>, transform_indices = @transform_1, window_bounds = array<i64: 16, 128>}, {pipeline_mode = #tpu.pipeline_mode<synchronous>, transform_indices = @transform_2, window_bounds = array<i64: 2, 128, 128>}, {pipeline_mode = #tpu.pipeline_mode<synchronous>, transform_indices = @transform_3, window_bounds = array<i64: 8, 128>}, {transform_indices = @transform_4, window_bounds = array<i64: 16, 128>}]} {
    %c0 = arith.constant 0 : index
    %c0_0 = arith.constant 0 : index
    %0 = vector.load %arg1[%c0, %c0_0] : memref<128x16xf32, #tpu.memory_space<vmem>>, vector<128x16xf32>
    %c0_1 = arith.constant 0 : index
    %c0_2 = arith.constant 0 : index
    %1 = vector.load %arg2[%c0_1, %c0_2] : memref<16x128xf32, #tpu.memory_space<vmem>>, vector<16x128xf32>
    %c0_3 = arith.constant 0 : index
    %c0_4 = arith.constant 0 : index
    %c0_5 = arith.constant 0 : index
    %2 = vector.load %arg3[%c0_3, %c0_4, %c0_5] : memref<2x128x128xf32, #tpu.memory_space<vmem>>, vector<1x128x128xf32>
    %3 = vector.shape_cast %2 : vector<1x128x128xf32> to vector<128x128xf32>
    %c1 = arith.constant 1 : index
    %c0_6 = arith.constant 0 : index
    %c0_7 = arith.constant 0 : index
    %4 = vector.load %arg3[%c1, %c0_6, %c0_7] : memref<2x128x128xf32, #tpu.memory_space<vmem>>, vector<1x128x128xf32>
    %5 = vector.shape_cast %4 : vector<1x128x128xf32> to vector<128x128xf32>
    %cst = arith.constant dense<0.000000e+00> : vector<128x128xf32>
    %6 = tpu.matmul %0, %1, %cst {dimension_numbers = #tpu.dot_dimension_numbers<[1], [0], [0], [1], [0, 0, 1, 1], [], []>} : vector<128x16xf32>, vector<16x128xf32>, vector<128x128xf32> -> vector<128x128xf32>
    %c0_8 = arith.constant 0 : index
    %c0_9 = arith.constant 0 : index
    %7 = vector.load %arg4[%c0_8, %c0_9] : memref<8x128xf32, #tpu.memory_space<vmem>>, vector<1x128xf32>
    %8 = vector.broadcast %7 : vector<1x128xf32> to vector<128x128xf32>
    %9 = arith.addf %6, %8 : vector<128x128xf32>
    %cst_10 = arith.constant 0.000000e+00 : f32
    %10 = vector.broadcast %cst_10 : f32 to vector<128x128xf32>
    %11 = arith.maximumf %9, %10 : vector<128x128xf32>
    %cst_11 = arith.constant dense<0.000000e+00> : vector<128x128xf32>
    %12 = tpu.matmul %11, %3, %cst_11 {dimension_numbers = #tpu.dot_dimension_numbers<[1], [0], [0], [1], [0, 0, 1, 1], [], []>} : vector<128x128xf32>, vector<128x128xf32>, vector<128x128xf32> -> vector<128x128xf32>
    %c1_12 = arith.constant 1 : index
    %c0_13 = arith.constant 0 : index
    %13 = vector.load %arg4[%c1_12, %c0_13] : memref<8x128xf32, #tpu.memory_space<vmem>>, vector<1x128xf32>
    %14 = vector.broadcast %13 : vector<1x128xf32> to vector<128x128xf32>
    %15 = arith.addf %12, %14 : vector<128x128xf32>
    %cst_14 = arith.constant 0.000000e+00 : f32
    %16 = vector.broadcast %cst_14 : f32 to vector<128x128xf32>
    %17 = arith.maximumf %15, %16 : vector<128x128xf32>
    %cst_15 = arith.constant dense<0.000000e+00> : vector<128x128xf32>
    %18 = tpu.matmul %17, %5, %cst_15 {dimension_numbers = #tpu.dot_dimension_numbers<[1], [0], [0], [1], [0, 0, 1, 1], [], []>} : vector<128x128xf32>, vector<128x128xf32>, vector<128x128xf32> -> vector<128x128xf32>
    %c2 = arith.constant 2 : index
    %c0_16 = arith.constant 0 : index
    %19 = vector.load %arg4[%c2, %c0_16] : memref<8x128xf32, #tpu.memory_space<vmem>>, vector<1x128xf32>
    %20 = vector.broadcast %19 : vector<1x128xf32> to vector<128x128xf32>
    %21 = arith.addf %18, %20 : vector<128x128xf32>
    %c3 = arith.constant 3 : index
    %c0_17 = arith.constant 0 : index
    %22 = vector.load %arg4[%c3, %c0_17] : memref<8x128xf32, #tpu.memory_space<vmem>>, vector<1x128xf32>
    %cst_18 = arith.constant 5.000000e-01 : f32
    %23 = vector.broadcast %cst_18 : f32 to vector<1x128xf32>
    %24 = arith.cmpf ogt, %22, %23 : vector<1x128xf32>
    %cst_19 = arith.constant 0xFF800000 : f32
    %25 = vector.shape_cast %24 : vector<1x128xi1> to vector<1x128xi1>
    %26 = vector.broadcast %25 : vector<1x128xi1> to vector<128x128xi1>
    %27 = vector.broadcast %cst_19 : f32 to vector<128x128xf32>
    %28 = arith.select %26, %21, %27 : vector<128x128xi1>, vector<128x128xf32>
    %cst_20 = arith.constant dense<0xFF800000> : vector<128xf32>
    %29 = vector.multi_reduction <maximumf>, %28, %cst_20 [1] : vector<128x128xf32> to vector<128xf32>
    %30 = vector.shape_cast %29 : vector<128xf32> to vector<128x1xf32>
    %31 = vector.broadcast %30 : vector<128x1xf32> to vector<128x128xf32>
    %32 = arith.subf %28, %31 : vector<128x128xf32>
    %33 = math.exp %32 : vector<128x128xf32>
    %cst_21 = arith.constant dense<0.000000e+00> : vector<128xf32>
    %34 = vector.multi_reduction <add>, %33, %cst_21 [1] : vector<128x128xf32> to vector<128xf32>
    %35 = vector.shape_cast %34 : vector<128xf32> to vector<128x1xf32>
    %36 = math.log %35 : vector<128x1xf32>
    %37 = arith.addf %30, %36 : vector<128x1xf32>
    %38 = vector.broadcast %37 : vector<128x1xf32> to vector<128x128xf32>
    %39 = arith.subf %21, %38 : vector<128x128xf32>
    %40 = vector.shape_cast %24 : vector<1x128xi1> to vector<1x128xi1>
    %41 = vector.broadcast %40 : vector<1x128xi1> to vector<128x128xi1>
    %42 = arith.select %41, %39, %21 : vector<128x128xi1>, vector<128x128xf32>
    %43 = tpu.transpose %42, [1, 0] : vector<128x128xf32> -> vector<128x128xf32>
    %44 = vector.extract_strided_slice %43 {offsets = [0, 0], sizes = [16, 128], strides = [1, 1]} : vector<128x128xf32> to vector<16x128xf32>
    %c0_22 = arith.constant 0 : index
    %c0_23 = arith.constant 0 : index
    %45 = vector.load %arg5[%c0_22, %c0_23] : memref<16x128xf32, #tpu.memory_space<vmem>>, vector<16x128xf32>
    tpu.vector_store %arg5[%c0_22, %c0_23], %44 {strides = array<i32>} : memref<16x128xf32, #tpu.memory_space<vmem>>, vector<16x128xf32>,
    return
  }
  func.func @transform_0(%arg0: i32) -> (i32, i32) {
    %c0_i32 = arith.constant 0 : i32
    %c0_i32_0 = arith.constant 0 : i32
    return %arg0, %c0_i32 : i32, i32
  }
  func.func @transform_1(%arg0: i32) -> (i32, i32) {
    %c0_i32 = arith.constant 0 : i32
    %c0_i32_0 = arith.constant 0 : i32
    %c0_i32_1 = arith.constant 0 : i32
    return %c0_i32, %c0_i32_0 : i32, i32
  }
  func.func @transform_2(%arg0: i32) -> (i32, i32, i32) {
    %c0_i32 = arith.constant 0 : i32
    %c0_i32_0 = arith.constant 0 : i32
    %c0_i32_1 = arith.constant 0 : i32
    %c0_i32_2 = arith.constant 0 : i32
    return %c0_i32, %c0_i32_0, %c0_i32_1 : i32, i32, i32
  }
  func.func @transform_3(%arg0: i32) -> (i32, i32) {
    %c0_i32 = arith.constant 0 : i32
    %c0_i32_0 = arith.constant 0 : i32
    %c0_i32_1 = arith.constant 0 : i32
    return %c0_i32, %c0_i32_0 : i32, i32
  }
  func.func @transform_4(%arg0: i32) -> (i32, i32) {
    %c0_i32 = arith.constant 0 : i32
    %c0_i32_0 = arith.constant 0 : i32
    return %c0_i32, %arg0 : i32, i32
  }
}

</mosaic_0001>

<llo_original>
// kernel: actor_critic_forward.1
$region0: #{actor_critic_forward.1}
  #allocation0 [shape = 'u32[]', space=smem, size = 0x4, offset = 0x4, fixed_abs, tag = 'smem constant byte address 0x4 - core index']
  #allocation1 [shape = 'u32[144,128]{1,0:T(1,128)}', space=vmem, size = 0x12000, scoped, tag = 'internal scratch']
  %s0 = inlined_call_operand.vmem [shape: f32[128,16], index: 0, kind: input, shape index: {}]
  %s1 = inlined_call_operand.vmem [shape: f32[16,128], index: 1, kind: input, shape index: {}]
  %s2 = inlined_call_operand.hbm [shape: f32[2,128,128], index: 2, kind: input, shape index: {}]
  %s3 = inlined_call_operand.vmem [shape: f32[8,128], index: 3, kind: input, shape index: {}]
  %s4 = inlined_call_operand.vmem [shape: f32[16,128], index: 4, kind: output, shape index: {}]
  %s5 = sld [smem:[#allocation0]]
  $region30: #{actor_critic_forward.1} parent=0
    _
  %s7 = ssub.s32 1, %s5
  %s8 = scalar_select 0, %s7, %s5
  $region1: #{actor_critic_forward.1} parent=0
    #allocation2 [shape = 'u8[131072]{0}', space=vmem, size = 0x20000, scoped, tag = 'input window, operand 2, single buffered']
    #allocation3 [shape = 's32[1]{0}', space=sflag, size = 0x4, scoped, tag = 'scoped memory for actor_critic_forward.1']
    %9 = vsyncpa [#allocation3], 0
    // Predicated region
    $region2: #{actor_critic_forward.1} parent=1 // pred_check
      _
    $region3: #{actor_critic_forward.1} parent=1 // pred_check_branch
      %11 = sbr.rel (0) target = $region5
    $region4: #{actor_critic_forward.1} parent=1 // pred_region
      _
    $region5: #{actor_critic_forward.1} parent=1 // pred_fallthru
      _
    // Predicated region
    $region6: #{actor_critic_forward.1} parent=1 // pred_check
      _
    $region7: #{actor_critic_forward.1} parent=1 // pred_check_branch
      %13 = sbr.rel (0) target = $region9
    $region8: #{actor_critic_forward.1} parent=1 // pred_region
      _
    $region9: #{actor_critic_forward.1} parent=1 // pred_fallthru
      _
    // Predicated region
    $region10: #{actor_critic_forward.1} parent=1 // pred_check
      _
    $region11: #{actor_critic_forward.1} parent=1 // pred_check_branch
      %15 = sbr.rel (0) target = $region13
    $region12: #{actor_critic_forward.1} parent=1 // pred_region
      %s17 = ssub.s32 4096, 4096
      %18 = vsyncadd [#allocation3], %s17
      %s19 = sshll.u32 [#allocation2], 4
      %s20 = int_to_ptr.vmem [resolvable:$true] %s19
      %25 = dma.hbm_to_vmem [thread:$0]  %s2, 4096, %s20, [#allocation3], 128, 128, 8
    $region13: #{actor_critic_forward.1} parent=1 // pred_fallthru
      _
    // Predicated region
    $region14: #{actor_critic_forward.1} parent=1 // pred_check
      _
    $region15: #{actor_critic_forward.1} parent=1 // pred_check_branch
      %27 = sbr.rel (0) target = $region17
    $region16: #{actor_critic_forward.1} parent=1 // pred_region
      _
    $region17: #{actor_critic_forward.1} parent=1 // pred_fallthru
      _
    // Predicated region
    $region18: #{actor_critic_forward.1} parent=1 // pred_check
      _
    $region19: #{actor_critic_forward.1} parent=1 // pred_check_branch
      %29 = sbr.rel (0) target = $region21
    $region20: #{actor_critic_forward.1} parent=1 // pred_region
      %30 = dma.done [#allocation3], 4096
    $region21: #{actor_critic_forward.1} parent=1 // pred_fallthru
      _
    %v31 = vld [vmem:[%s0] sm:$0xff]
    %v32 = vld [vmem:[%s0 + $0x8] sm:$0xff]
    %v33 = vld [vmem:[%s0 + $0x10] sm:$0xff]
    %v34 = vld [vmem:[%s0 + $0x18] sm:$0xff]
    %v35 = vld [vmem:[%s0 + $0x20] sm:$0xff]
    %v36 = vld [vmem:[%s0 + $0x28] sm:$0xff]
    %v37 = vld [vmem:[%s0 + $0x30] sm:$0xff]
    %v38 = vld [vmem:[%s0 + $0x38] sm:$0xff]
    %v39 = vld [vmem:[%s0 + $0x40] sm:$0xff]
    %v40 = vld [vmem:[%s0 + $0x48] sm:$0xff]
    %v41 = vld [vmem:[%s0 + $0x50] sm:$0xff]
    %v42 = vld [vmem:[%s0 + $0x58] sm:$0xff]
    %v43 = vld [vmem:[%s0 + $0x60] sm:$0xff]
    %v44 = vld [vmem:[%s0 + $0x68] sm:$0xff]
    %v45 = vld [vmem:[%s0 + $0x70] sm:$0xff]
    %v46 = vld [vmem:[%s0 + $0x78] sm:$0xff]
    %v47 = vld [vmem:[%s1] sm:$0xff]
    %v48 = vld [vmem:[%s1 + $0x8] sm:$0xff]
    %v49 = vld [vmem:[#allocation2] sm:$0xff]
    %v50 = vld [vmem:[#allocation2 + $0x8] sm:$0xff]
    %v51 = vld [vmem:[#allocation2 + $0x10] sm:$0xff]
    %v52 = vld [vmem:[#allocation2 + $0x18] sm:$0xff]
    %v53 = vld [vmem:[#allocation2 + $0x20] sm:$0xff]
    %v54 = vld [vmem:[#allocation2 + $0x28] sm:$0xff]
    %v55 = vld [vmem:[#allocation2 + $0x30] sm:$0xff]
    %v56 = vld [vmem:[#allocation2 + $0x38] sm:$0xff]
    %v57 = vld [vmem:[#allocation2 + $0x40] sm:$0xff]
    %v58 = vld [vmem:[#allocation2 + $0x48] sm:$0xff]
    %v59 = vld [vmem:[#allocation2 + $0x50] sm:$0xff]
    %v60 = vld [vmem:[#allocation2 + $0x58] sm:$0xff]
    %v61 = vld [vmem:[#allocation2 + $0x60] sm:$0xff]
    %v62 = vld [vmem:[#allocation2 + $0x68] sm:$0xff]
    %v63 = vld [vmem:[#allocation2 + $0x70] sm:$0xff]
    %v64 = vld [vmem:[#allocation2 + $0x78] sm:$0xff]
    %s65 = scalar_lea.vmem [#allocation2], 128
    %v66 = vld [vmem:[%s65] sm:$0xff]
    %v67 = vld [vmem:[%s65 + $0x8] sm:$0xff]
    %v68 = vld [vmem:[%s65 + $0x10] sm:$0xff]
    %v69 = vld [vmem:[%s65 + $0x18] sm:$0xff]
    %v70 = vld [vmem:[%s65 + $0x20] sm:$0xff]
    %v71 = vld [vmem:[%s65 + $0x28] sm:$0xff]
    %v72 = vld [vmem:[%s65 + $0x30] sm:$0xff]
    %v73 = vld [vmem:[%s65 + $0x38] sm:$0xff]
    %v74 = vld [vmem:[%s65 + $0x40] sm:$0xff]
    %v75 = vld [vmem:[%s65 + $0x48] sm:$0xff]
    %v76 = vld [vmem:[%s65 + $0x50] sm:$0xff]
    %v77 = vld [vmem:[%s65 + $0x58] sm:$0xff]
    %v78 = vld [vmem:[%s65 + $0x60] sm:$0xff]
    %v79 = vld [vmem:[%s65 + $0x68] sm:$0xff]
    %v80 = vld [vmem:[%s65 + $0x70] sm:$0xff]
    %v81 = vld [vmem:[%s65 + $0x78] sm:$0xff]
    %v82 = vld [vmem:[%s3] sm:$0x1]
    %v83 = vlaneseq
    %v84 = vshrl.u32 %v83, 7
    %v85 = vsub.s32 0, %v84
    %v86 = vrot.slane %v82, %v85
    %vm87 = vcmask 130048
    %v89 = vsel %vm87, %v31, 0
    %v92 = vsel %vm87, %v32, 0
    %v95 = vsel %vm87, %v33, 0
    %v98 = vsel %vm87, %v34, 0
    %v101 = vsel %vm87, %v35, 0
    %v104 = vsel %vm87, %v36, 0
    %v107 = vsel %vm87, %v37, 0
    %v110 = vsel %vm87, %v38, 0
    %v113 = vsel %vm87, %v39, 0
    %v116 = vsel %vm87, %v40, 0
    %v119 = vsel %vm87, %v41, 0
    %v122 = vsel %vm87, %v42, 0
    %v125 = vsel %vm87, %v43, 0
    %v128 = vsel %vm87, %v44, 0
    %v131 = vsel %vm87, %v45, 0
    %v134 = vsel %vm87, %v46, 0
    %136 = vmatprep.subr.mxu0 0.0
    %137 = vmatpush1.msra.mxu0 %v47
    %138 = vmatprep.subr.mxu0 0.0
    %139 = vmatpush1.msra.mxu0 %v48
    %140 = vmatprep.subr.mxu0 0.0
    %141 = vmatpush1.msra.mxu0 0.0
    %142 = vmatprep.subr.mxu0 0.0
    %143 = vmatpush1.msra.mxu0 0.0
    %144 = vmatprep.subr.mxu0 0.0
    %145 = vmatpush1.msra.mxu0 0.0
    %146 = vmatprep.subr.mxu0 0.0
    %147 = vmatpush1.msra.mxu0 0.0
    %148 = vmatprep.subr.mxu0 0.0
    %149 = vmatpush1.msra.mxu0 0.0
    %150 = vmatprep.subr.mxu0 0.0
    %151 = vmatpush1.msra.mxu0 0.0
    %152 = vmatprep.subr.mxu0 0.0
    %153 = vmatpush1.msra.mxu0 0.0
    %154 = vmatprep.subr.mxu0 0.0
    %155 = vmatpush1.msra.mxu0 0.0
    %156 = vmatprep.subr.mxu0 0.0
    %157 = vmatpush1.msra.mxu0 0.0
    %158 = vmatprep.subr.mxu0 0.0
    %159 = vmatpush1.msra.mxu0 0.0
    %160 = vmatprep.subr.mxu0 0.0
    %161 = vmatpush1.msra.mxu0 0.0
    %162 = vmatprep.subr.mxu0 0.0
    %163 = vmatpush1.msra.mxu0 0.0
    %164 = vmatprep.subr.mxu0 0.0
    %165 = vmatpush1.msra.mxu0 0.0
    %166 = vmatprep.subr.mxu0 0.0
    %167 = vmatpush1.msra.mxu0 0.0
    %168 = vmatprep.subr.mxu0 0.0
    %169 = vmatpush1.msra.mxu0 0.0
    %170 = vmatprep.subr.mxu0 0.0
    %171 = vmatpush1.msra.mxu0 0.0
    %172 = vmatprep.subr.mxu0 0.0
    %173 = vmatpush1.msra.mxu0 0.0
    %174 = vmatprep.subr.mxu0 0.0
    %175 = vmatpush1.msra.mxu0 0.0
    %176 = vmatprep.subr.mxu0 0.0
    %177 = vmatpush1.msra.mxu0 0.0
    %178 = vmatprep.subr.mxu0 0.0
    %179 = vmatpush1.msra.mxu0 0.0
    %180 = vmatprep.subr.mxu0 0.0
    %181 = vmatpush1.msra.mxu0 0.0
    %182 = vmatprep.subr.mxu0 0.0
    %183 = vmatpush1.msra.mxu0 0.0
    %184 = vmatprep.subr.mxu0 0.0
    %185 = vmatpush1.msra.mxu0 0.0
    %186 = vmatprep.subr.mxu0 0.0
    %187 = vmatpush1.msra.mxu0 0.0
    %188 = vmatprep.subr.mxu0 0.0
    %189 = vmatpush1.msra.mxu0 0.0
    %190 = vmatprep.subr.mxu0 0.0
    %191 = vmatpush1.msra.mxu0 0.0
    %192 = vmatprep.subr.mxu0 0.0
    %193 = vmatpush1.msra.mxu0 0.0
    %194 = vmatprep.subr.mxu0 0.0
    %195 = vmatpush1.msra.mxu0 0.0
    %196 = vmatprep.subr.mxu0 0.0
    %197 = vmatpush1.msra.mxu0 0.0
    %198 = vmatprep.subr.mxu0 0.0
    %199 = vmatpush1.msra.mxu0 0.0
    %200 = vmatprep.mubr.f32.mxu0 0.0
    %201 = vmatmul.mubr.f32.gmra.mrb[0].mxu0 %v89
    %v202 = vpop.f32.mrb[0].mxu0
    %v203 = vadd.f32 %v86, %v202
    %v204 = vpop.f32.mrb[0].mxu0
    %205 = vmatprep.mubr.f32.mxu0 0.0
    %206 = vmatmul.mubr.f32.gmra.mrb[0].mxu0 %v92
    %v207 = vpop.f32.mrb[0].mxu0
    %v208 = vadd.f32 %v86, %v207
    %v209 = vpop.f32.mrb[0].mxu0
    %210 = vmatprep.mubr.f32.mxu0 0.0
    %211 = vmatmul.mubr.f32.gmra.mrb[0].mxu0 %v95
    %v212 = vpop.f32.mrb[0].mxu0
    %v213 = vadd.f32 %v86, %v212
    %v214 = vpop.f32.mrb[0].mxu0
    %215 = vmatprep.mubr.f32.mxu0 0.0
    %216 = vmatmul.mubr.f32.gmra.mrb[0].mxu0 %v98
    %v217 = vpop.f32.mrb[0].mxu0
    %v218 = vadd.f32 %v86, %v217
    %v219 = vpop.f32.mrb[0].mxu0
    %220 = vmatprep.mubr.f32.mxu0 0.0
    %221 = vmatmul.mubr.f32.gmra.mrb[0].mxu0 %v101
    %v222 = vpop.f32.mrb[0].mxu0
    %v223 = vadd.f32 %v86, %v222
    %v224 = vpop.f32.mrb[0].mxu0
    %225 = vmatprep.mubr.f32.mxu0 0.0
    %226 = vmatmul.mubr.f32.gmra.mrb[0].mxu0 %v104
    %v227 = vpop.f32.mrb[0].mxu0
    %v228 = vadd.f32 %v86, %v227
    %v229 = vpop.f32.mrb[0].mxu0
    %230 = vmatprep.mubr.f32.mxu0 0.0
    %231 = vmatmul.mubr.f32.gmra.mrb[0].mxu0 %v107
    %v232 = vpop.f32.mrb[0].mxu0
    %v233 = vadd.f32 %v86, %v232
    %v234 = vpop.f32.mrb[0].mxu0
    %235 = vmatprep.mubr.f32.mxu0 0.0
    %236 = vmatmul.mubr.f32.gmra.mrb[0].mxu0 %v110
    %v237 = vpop.f32.mrb[0].mxu0
    %v238 = vadd.f32 %v86, %v237
    %v239 = vpop.f32.mrb[0].mxu0
    %240 = vmatprep.mubr.f32.mxu0 0.0
    %241 = vmatmul.mubr.f32.gmra.mrb[0].mxu0 %v113
    %v242 = vpop.f32.mrb[0].mxu0
    %v243 = vadd.f32 %v86, %v242
    %v244 = vpop.f32.mrb[0].mxu0
    %245 = vmatprep.mubr.f32.mxu0 0.0
    %246 = vmatmul.mubr.f32.gmra.mrb[0].mxu0 %v116
    %v247 = vpop.f32.mrb[0].mxu0
    %v248 = vadd.f32 %v86, %v247
    %v249 = vpop.f32.mrb[0].mxu0
    %250 = vmatprep.mubr.f32.mxu0 0.0
    %251 = vmatmul.mubr.f32.gmra.mrb[0].mxu0 %v119
    %v252 = vpop.f32.mrb[0].mxu0
    %v253 = vadd.f32 %v86, %v252
    %v254 = vpop.f32.mrb[0].mxu0
    %255 = vmatprep.mubr.f32.mxu0 0.0
    %256 = vmatmul.mubr.f32.gmra.mrb[0].mxu0 %v122
    %v257 = vpop.f32.mrb[0].mxu0
    %v258 = vadd.f32 %v86, %v257
    %v259 = vpop.f32.mrb[0].mxu0
    %260 = vmatprep.mubr.f32.mxu0 0.0
    %261 = vmatmul.mubr.f32.gmra.mrb[0].mxu0 %v125
    %v262 = vpop.f32.mrb[0].mxu0
    %v263 = vadd.f32 %v86, %v262
    %v264 = vpop.f32.mrb[0].mxu0
    %265 = vmatprep.mubr.f32.mxu0 0.0
    %266 = vmatmul.mubr.f32.gmra.mrb[0].mxu0 %v128
    %v267 = vpop.f32.mrb[0].mxu0
    %v268 = vadd.f32 %v86, %v267
    %v269 = vpop.f32.mrb[0].mxu0
    %270 = vmatprep.mubr.f32.mxu0 0.0
    %271 = vmatmul.mubr.f32.gmra.mrb[0].mxu0 %v131
    %v272 = vpop.f32.mrb[0].mxu0
    %v273 = vadd.f32 %v86, %v272
    %v274 = vpop.f32.mrb[0].mxu0
    %275 = vmatprep.mubr.f32.mxu0 0.0
    %276 = vmatmul.mubr.f32.gmra.mrb[0].mxu0 %v134
    %v277 = vpop.f32.mrb[0].mxu0
    %v278 = vadd.f32 %v86, %v277
    %v279 = vpop.f32.mrb[0].mxu0
    %280 = vdwg.mxu0
    %v281 = vmax.f32 %v203, 0.0
    %v282 = vmax.f32 %v208, 0.0
    %v283 = vmax.f32 %v213, 0.0
    %v284 = vmax.f32 %v218, 0.0
    %v285 = vmax.f32 %v223, 0.0
    %v286 = vmax.f32 %v228, 0.0
    %v287 = vmax.f32 %v233, 0.0
    %v288 = vmax.f32 %v238, 0.0
    %v289 = vmax.f32 %v243, 0.0
    %v290 = vmax.f32 %v248, 0.0
    %v291 = vmax.f32 %v253, 0.0
    %v292 = vmax.f32 %v258, 0.0
    %v293 = vmax.f32 %v263, 0.0
    %v294 = vmax.f32 %v268, 0.0
    %v295 = vmax.f32 %v273, 0.0
    %v296 = vmax.f32 %v278, 0.0
    %v297 = vld [vmem:[%s3 + $0x1] sm:$0x1]
    %v298 = vlaneseq
    %v299 = vshrl.u32 %v298, 7
    %v300 = vsub.s32 0, %v299
    %v301 = vrot.slane %v297, %v300
    %302 = vmatprep.subr.mxu0 0.0
    %303 = vmatpush1.msra.mxu0 %v49
    %304 = vmatprep.subr.mxu0 0.0
    %305 = vmatpush1.msra.mxu0 %v50
    %306 = vmatprep.subr.mxu0 0.0
    %307 = vmatpush1.msra.mxu0 %v51
    %308 = vmatprep.subr.mxu0 0.0
    %309 = vmatpush1.msra.mxu0 %v52
    %310 = vmatprep.subr.mxu0 0.0
    %311 = vmatpush1.msra.mxu0 %v53
    %312 = vmatprep.subr.mxu0 0.0
    %313 = vmatpush1.msra.mxu0 %v54
    %314 = vmatprep.subr.mxu0 0.0
    %315 = vmatpush1.msra.mxu0 %v55
    %316 = vmatprep.subr.mxu0 0.0
    %317 = vmatpush1.msra.mxu0 %v56
    %318 = vmatprep.subr.mxu0 0.0
    %319 = vmatpush1.msra.mxu0 %v57
    %320 = vmatprep.subr.mxu0 0.0
    %321 = vmatpush1.msra.mxu0 %v58
    %322 = vmatprep.subr.mxu0 0.0
    %323 = vmatpush1.msra.mxu0 %v59
    %324 = vmatprep.subr.mxu0 0.0
    %325 = vmatpush1.msra.mxu0 %v60
    %326 = vmatprep.subr.mxu0 0.0
    %327 = vmatpush1.msra.mxu0 %v61
    %328 = vmatprep.subr.mxu0 0.0
    %329 = vmatpush1.msra.mxu0 %v62
    %330 = vmatprep.subr.mxu0 0.0
    %331 = vmatpush1.msra.mxu0 %v63
    %332 = vmatprep.subr.mxu0 0.0
    %333 = vmatpush1.msra.mxu0 %v64
    %334 = vmatprep.subr.mxu0 0.0
    %335 = vmatpush1.msra.mxu0 0.0
    %336 = vmatprep.subr.mxu0 0.0
    %337 = vmatpush1.msra.mxu0 0.0
    %338 = vmatprep.subr.mxu0 0.0
    %339 = vmatpush1.msra.mxu0 0.0
    %340 = vmatprep.subr.mxu0 0.0
    %341 = vmatpush1.msra.mxu0 0.0
    %342 = vmatprep.subr.mxu0 0.0
    %343 = vmatpush1.msra.mxu0 0.0
    %344 = vmatprep.subr.mxu0 0.0
    %345 = vmatpush1.msra.mxu0 0.0
    %346 = vmatprep.subr.mxu0 0.0
    %347 = vmatpush1.msra.mxu0 0.0
    %348 = vmatprep.subr.mxu0 0.0
    %349 = vmatpush1.msra.mxu0 0.0
    %350 = vmatprep.subr.mxu0 0.0
    %351 = vmatpush1.msra.mxu0 0.0
    %352 = vmatprep.subr.mxu0 0.0
    %353 = vmatpush1.msra.mxu0 0.0
    %354 = vmatprep.subr.mxu0 0.0
    %355 = vmatpush1.msra.mxu0 0.0
    %356 = vmatprep.subr.mxu0 0.0
    %357 = vmatpush1.msra.mxu0 0.0
    %358 = vmatprep.subr.mxu0 0.0
    %359 = vmatpush1.msra.mxu0 0.0
    %360 = vmatprep.subr.mxu0 0.0
    %361 = vmatpush1.msra.mxu0 0.0
    %362 = vmatprep.subr.mxu0 0.0
    %363 = vmatpush1.msra.mxu0 0.0
    %364 = vmatprep.subr.mxu0 0.0
    %365 = vmatpush1.msra.mxu0 0.0
    %366 = vmatprep.mubr.f32.mxu0 0.0
    %367 = vmatmul.mubr.f32.gmra.mrb[0].mxu0 %v281
    %v368 = vpop.f32.mrb[0].mxu0
    %v369 = vadd.f32 %v301, %v368
    %v370 = vpop.f32.mrb[0].mxu0
    %371 = vmatprep.mubr.f32.mxu0 0.0
    %372 = vmatmul.mubr.f32.gmra.mrb[0].mxu0 %v282
    %v373 = vpop.f32.mrb[0].mxu0
    %v374 = vadd.f32 %v301, %v373
    %v375 = vpop.f32.mrb[0].mxu0
    %376 = vmatprep.mubr.f32.mxu0 0.0
    %377 = vmatmul.mubr.f32.gmra.mrb[0].mxu0 %v283
    %v378 = vpop.f32.mrb[0].mxu0
    %v379 = vadd.f32 %v301, %v378
    %v380 = vpop.f32.mrb[0].mxu0
    %381 = vmatprep.mubr.f32.mxu0 0.0
    %382 = vmatmul.mubr.f32.gmra.mrb[0].mxu0 %v284
    %v383 = vpop.f32.mrb[0].mxu0
    %v384 = vadd.f32 %v301, %v383
    %v385 = vpop.f32.mrb[0].mxu0
    %386 = vmatprep.mubr.f32.mxu0 0.0
    %387 = vmatmul.mubr.f32.gmra.mrb[0].mxu0 %v285
    %v388 = vpop.f32.mrb[0].mxu0
    %v389 = vadd.f32 %v301, %v388
    %v390 = vpop.f32.mrb[0].mxu0
    %391 = vmatprep.mubr.f32.mxu0 0.0
    %392 = vmatmul.mubr.f32.gmra.mrb[0].mxu0 %v286
    %v393 = vpop.f32.mrb[0].mxu0
    %v394 = vadd.f32 %v301, %v393
    %v395 = vpop.f32.mrb[0].mxu0
    %396 = vmatprep.mubr.f32.mxu0 0.0
    %397 = vmatmul.mubr.f32.gmra.mrb[0].mxu0 %v287
    %v398 = vpop.f32.mrb[0].mxu0
    %v399 = vadd.f32 %v301, %v398
    %v400 = vpop.f32.mrb[0].mxu0
    %401 = vmatprep.mubr.f32.mxu0 0.0
    %402 = vmatmul.mubr.f32.gmra.mrb[0].mxu0 %v288
    %v403 = vpop.f32.mrb[0].mxu0
    %v404 = vadd.f32 %v301, %v403
    %v405 = vpop.f32.mrb[0].mxu0
    %406 = vmatprep.mubr.f32.mxu0 0.0
    %407 = vmatmul.mubr.f32.gmra.mrb[0].mxu0 %v289
    %v408 = vpop.f32.mrb[0].mxu0
    %v409 = vadd.f32 %v301, %v408
    %v410 = vpop.f32.mrb[0].mxu0
    %411 = vmatprep.mubr.f32.mxu0 0.0
    %412 = vmatmul.mubr.f32.gmra.mrb[0].mxu0 %v290
    %v413 = vpop.f32.mrb[0].mxu0
    %v414 = vadd.f32 %v301, %v413
    %v415 = vpop.f32.mrb[0].mxu0
    %416 = vmatprep.mubr.f32.mxu0 0.0
    %417 = vmatmul.mubr.f32.gmra.mrb[0].mxu0 %v291
    %v418 = vpop.f32.mrb[0].mxu0
    %v419 = vadd.f32 %v301, %v418
    %v420 = vpop.f32.mrb[0].mxu0
    %421 = vmatprep.mubr.f32.mxu0 0.0
    %422 = vmatmul.mubr.f32.gmra.mrb[0].mxu0 %v292
    %v423 = vpop.f32.mrb[0].mxu0
    %v424 = vadd.f32 %v301, %v423
    %v425 = vpop.f32.mrb[0].mxu0
    %426 = vmatprep.mubr.f32.mxu0 0.0
    %427 = vmatmul.mubr.f32.gmra.mrb[0].mxu0 %v293
    %v428 = vpop.f32.mrb[0].mxu0
    %v429 = vadd.f32 %v301, %v428
    %v430 = vpop.f32.mrb[0].mxu0
    %431 = vmatprep.mubr.f32.mxu0 0.0
    %432 = vmatmul.mubr.f32.gmra.mrb[0].mxu0 %v294
    %v433 = vpop.f32.mrb[0].mxu0
    %v434 = vadd.f32 %v301, %v433
    %v435 = vpop.f32.mrb[0].mxu0
    %436 = vmatprep.mubr.f32.mxu0 0.0
    %437 = vmatmul.mubr.f32.gmra.mrb[0].mxu0 %v295
    %v438 = vpop.f32.mrb[0].mxu0
    %v439 = vadd.f32 %v301, %v438
    %v440 = vpop.f32.mrb[0].mxu0
    %441 = vmatprep.mubr.f32.mxu0 0.0
    %442 = vmatmul.mubr.f32.gmra.mrb[0].mxu0 %v296
    %v443 = vpop.f32.mrb[0].mxu0
    %v444 = vadd.f32 %v301, %v443
    %v445 = vpop.f32.mrb[0].mxu0
    %446 = vdwg.mxu0
    %v447 = vmax.f32 %v369, 0.0
    %v448 = vmax.f32 %v374, 0.0
    %v449 = vmax.f32 %v379, 0.0
    %v450 = vmax.f32 %v384, 0.0
    %v451 = vmax.f32 %v389, 0.0
    %v452 = vmax.f32 %v394, 0.0
    %v453 = vmax.f32 %v399, 0.0
    %v454 = vmax.f32 %v404, 0.0
    %v455 = vmax.f32 %v409, 0.0
    %v456 = vmax.f32 %v414, 0.0
    %v457 = vmax.f32 %v419, 0.0
    %v458 = vmax.f32 %v424, 0.0
    %v459 = vmax.f32 %v429, 0.0
    %v460 = vmax.f32 %v434, 0.0
    %v461 = vmax.f32 %v439, 0.0
    %v462 = vmax.f32 %v444, 0.0
    %v463 = vld [vmem:[%s3 + $0x2] sm:$0x1]
    %v464 = vlaneseq
    %v465 = vshrl.u32 %v464, 7
    %v466 = vsub.s32 0, %v465
    %v467 = vrot.slane %v463, %v466
    %468 = vmatprep.subr.mxu0 0.0
    %469 = vmatpush1.msra.mxu0 %v66
    %470 = vmatprep.subr.mxu0 0.0
    %471 = vmatpush1.msra.mxu0 %v67
    %472 = vmatprep.subr.mxu0 0.0
    %473 = vmatpush1.msra.mxu0 %v68
    %474 = vmatprep.subr.mxu0 0.0
    %475 = vmatpush1.msra.mxu0 %v69
    %476 = vmatprep.subr.mxu0 0.0
    %477 = vmatpush1.msra.mxu0 %v70
    %478 = vmatprep.subr.mxu0 0.0
    %479 = vmatpush1.msra.mxu0 %v71
    %480 = vmatprep.subr.mxu0 0.0
    %481 = vmatpush1.msra.mxu0 %v72
    %482 = vmatprep.subr.mxu0 0.0
    %483 = vmatpush1.msra.mxu0 %v73
    %484 = vmatprep.subr.mxu0 0.0
    %485 = vmatpush1.msra.mxu0 %v74
    %486 = vmatprep.subr.mxu0 0.0
    %487 = vmatpush1.msra.mxu0 %v75
    %488 = vmatprep.subr.mxu0 0.0
    %489 = vmatpush1.msra.mxu0 %v76
    %490 = vmatprep.subr.mxu0 0.0
    %491 = vmatpush1.msra.mxu0 %v77
    %492 = vmatprep.subr.mxu0 0.0
    %493 = vmatpush1.msra.mxu0 %v78
    %494 = vmatprep.subr.mxu0 0.0
    %495 = vmatpush1.msra.mxu0 %v79
    %496 = vmatprep.subr.mxu0 0.0
    %497 = vmatpush1.msra.mxu0 %v80
    %498 = vmatprep.subr.mxu0 0.0
    %499 = vmatpush1.msra.mxu0 %v81
    %500 = vmatprep.subr.mxu0 0.0
    %501 = vmatpush1.msra.mxu0 0.0
    %502 = vmatprep.subr.mxu0 0.0
    %503 = vmatpush1.msra.mxu0 0.0
    %504 = vmatprep.subr.mxu0 0.0
    %505 = vmatpush1.msra.mxu0 0.0
    %506 = vmatprep.subr.mxu0 0.0
    %507 = vmatpush1.msra.mxu0 0.0
    %508 = vmatprep.subr.mxu0 0.0
    %509 = vmatpush1.msra.mxu0 0.0
    %510 = vmatprep.subr.mxu0 0.0
    %511 = vmatpush1.msra.mxu0 0.0
    %512 = vmatprep.subr.mxu0 0.0
    %513 = vmatpush1.msra.mxu0 0.0
    %514 = vmatprep.subr.mxu0 0.0
    %515 = vmatpush1.msra.mxu0 0.0
    %516 = vmatprep.subr.mxu0 0.0
    %517 = vmatpush1.msra.mxu0 0.0
    %518 = vmatprep.subr.mxu0 0.0
    %519 = vmatpush1.msra.mxu0 0.0
    %520 = vmatprep.subr.mxu0 0.0
    %521 = vmatpush1.msra.mxu0 0.0
    %522 = vmatprep.subr.mxu0 0.0
    %523 = vmatpush1.msra.mxu0 0.0
    %524 = vmatprep.subr.mxu0 0.0
    %525 = vmatpush1.msra.mxu0 0.0
    %526 = vmatprep.subr.mxu0 0.0
    %527 = vmatpush1.msra.mxu0 0.0
    %528 = vmatprep.subr.mxu0 0.0
    %529 = vmatpush1.msra.mxu0 0.0
    %530 = vmatprep.subr.mxu0 0.0
    %531 = vmatpush1.msra.mxu0 0.0
    %532 = vmatprep.mubr.f32.mxu0 0.0
    %533 = vmatmul.mubr.f32.gmra.mrb[0].mxu0 %v447
    %v534 = vpop.f32.mrb[0].mxu0
    %v535 = vadd.f32 %v467, %v534
    %v536 = vpop.f32.mrb[0].mxu0
    %537 = vmatprep.mubr.f32.mxu0 0.0
    %538 = vmatmul.mubr.f32.gmra.mrb[0].mxu0 %v448
    %v539 = vpop.f32.mrb[0].mxu0
    %v540 = vadd.f32 %v467, %v539
    %v541 = vpop.f32.mrb[0].mxu0
    %542 = vmatprep.mubr.f32.mxu0 0.0
    %543 = vmatmul.mubr.f32.gmra.mrb[0].mxu0 %v449
    %v544 = vpop.f32.mrb[0].mxu0
    %v545 = vadd.f32 %v467, %v544
    %v546 = vpop.f32.mrb[0].mxu0
    %547 = vmatprep.mubr.f32.mxu0 0.0
    %548 = vmatmul.mubr.f32.gmra.mrb[0].mxu0 %v450
    %v549 = vpop.f32.mrb[0].mxu0
    %v550 = vadd.f32 %v467, %v549
    %v551 = vpop.f32.mrb[0].mxu0
    %552 = vmatprep.mubr.f32.mxu0 0.0
    %553 = vmatmul.mubr.f32.gmra.mrb[0].mxu0 %v451
    %v554 = vpop.f32.mrb[0].mxu0
    %v555 = vadd.f32 %v467, %v554
    %v556 = vpop.f32.mrb[0].mxu0
    %557 = vmatprep.mubr.f32.mxu0 0.0
    %558 = vmatmul.mubr.f32.gmra.mrb[0].mxu0 %v452
    %v559 = vpop.f32.mrb[0].mxu0
    %v560 = vadd.f32 %v467, %v559
    %v561 = vpop.f32.mrb[0].mxu0
    %562 = vmatprep.mubr.f32.mxu0 0.0
    %563 = vmatmul.mubr.f32.gmra.mrb[0].mxu0 %v453
    %v564 = vpop.f32.mrb[0].mxu0
    %v565 = vadd.f32 %v467, %v564
    %v566 = vpop.f32.mrb[0].mxu0
    %567 = vmatprep.mubr.f32.mxu0 0.0
    %568 = vmatmul.mubr.f32.gmra.mrb[0].mxu0 %v454
    %v569 = vpop.f32.mrb[0].mxu0
    %v570 = vadd.f32 %v467, %v569
    %v571 = vpop.f32.mrb[0].mxu0
    %572 = vmatprep.mubr.f32.mxu0 0.0
    %573 = vmatmul.mubr.f32.gmra.mrb[0].mxu0 %v455
    %v574 = vpop.f32.mrb[0].mxu0
    %v575 = vadd.f32 %v467, %v574
    %v576 = vpop.f32.mrb[0].mxu0
    %577 = vmatprep.mubr.f32.mxu0 0.0
    %578 = vmatmul.mubr.f32.gmra.mrb[0].mxu0 %v456
    %v579 = vpop.f32.mrb[0].mxu0
    %v580 = vadd.f32 %v467, %v579
    %v581 = vpop.f32.mrb[0].mxu0
    %582 = vmatprep.mubr.f32.mxu0 0.0
    %583 = vmatmul.mubr.f32.gmra.mrb[0].mxu0 %v457
    %v584 = vpop.f32.mrb[0].mxu0
    %v585 = vadd.f32 %v467, %v584
    %v586 = vpop.f32.mrb[0].mxu0
    %587 = vmatprep.mubr.f32.mxu0 0.0
    %588 = vmatmul.mubr.f32.gmra.mrb[0].mxu0 %v458
    %v589 = vpop.f32.mrb[0].mxu0
    %v590 = vadd.f32 %v467, %v589
    %v591 = vpop.f32.mrb[0].mxu0
    %592 = vmatprep.mubr.f32.mxu0 0.0
    %593 = vmatmul.mubr.f32.gmra.mrb[0].mxu0 %v459
    %v594 = vpop.f32.mrb[0].mxu0
    %v595 = vadd.f32 %v467, %v594
    %v596 = vpop.f32.mrb[0].mxu0
    %597 = vmatprep.mubr.f32.mxu0 0.0
    %598 = vmatmul.mubr.f32.gmra.mrb[0].mxu0 %v460
    %v599 = vpop.f32.mrb[0].mxu0
    %v600 = vadd.f32 %v467, %v599
    %v601 = vpop.f32.mrb[0].mxu0
    %602 = vmatprep.mubr.f32.mxu0 0.0
    %603 = vmatmul.mubr.f32.gmra.mrb[0].mxu0 %v461
    %v604 = vpop.f32.mrb[0].mxu0
    %v605 = vadd.f32 %v467, %v604
    %v606 = vpop.f32.mrb[0].mxu0
    %607 = vmatprep.mubr.f32.mxu0 0.0
    %608 = vmatmul.mubr.f32.gmra.mrb[0].mxu0 %v462
    %v609 = vpop.f32.mrb[0].mxu0
    %v610 = vadd.f32 %v467, %v609
    %v611 = vpop.f32.mrb[0].mxu0
    %612 = vdwg.mxu0
    %v613 = vld [vmem:[%s3 + $0x3] sm:$0x1]
    %vm614 = vcmp.gt.f32.partialorder %v613, 0.5
    %v615 = vsel %vm614, 1, 0
    %v616 = vlaneseq
    %v617 = vshrl.u32 %v616, 7
    %v618 = vsub.s32 0, %v617
    %v619 = vrot.slane %v615, %v618
    %vm620 = vcmp.eq.s32.totalorder %v619, 1
    %v621 = vsel %vm620, %v535, -inf
    %v622 = vsel %vm620, %v540, -inf
    %v623 = vsel %vm620, %v545, -inf
    %v624 = vsel %vm620, %v550, -inf
    %v625 = vsel %vm620, %v555, -inf
    %v626 = vsel %vm620, %v560, -inf
    %v627 = vsel %vm620, %v565, -inf
    %v628 = vsel %vm620, %v570, -inf
    %v629 = vsel %vm620, %v575, -inf
    %v630 = vsel %vm620, %v580, -inf
    %v631 = vsel %vm620, %v585, -inf
    %v632 = vsel %vm620, %v590, -inf
    %v633 = vsel %vm620, %v595, -inf
    %v634 = vsel %vm620, %v600, -inf
    %v635 = vsel %vm620, %v605, -inf
    %v636 = vsel %vm620, %v610, -inf
    %637 = vmax.xlane.f32.xlu0 %v621
    %v638 = vpop.xlane.xlu0 %637
    %639 = vmax.xlane.f32.xlu0 %v622
    %v640 = vpop.xlane.xlu0 %639
    %641 = vmax.xlane.f32.xlu0 %v623
    %v642 = vpop.xlane.xlu0 %641
    %643 = vmax.xlane.f32.xlu0 %v624
    %v644 = vpop.xlane.xlu0 %643
    %645 = vmax.xlane.f32.xlu0 %v625
    %v646 = vpop.xlane.xlu0 %645
    %647 = vmax.xlane.f32.xlu0 %v626
    %v648 = vpop.xlane.xlu0 %647
    %649 = vmax.xlane.f32.xlu0 %v627
    %v650 = vpop.xlane.xlu0 %649
    %651 = vmax.xlane.f32.xlu0 %v628
    %v652 = vpop.xlane.xlu0 %651
    %653 = vmax.xlane.f32.xlu0 %v629
    %v654 = vpop.xlane.xlu0 %653
    %655 = vmax.xlane.f32.xlu0 %v630
    %v656 = vpop.xlane.xlu0 %655
    %657 = vmax.xlane.f32.xlu0 %v631
    %v658 = vpop.xlane.xlu0 %657
    %659 = vmax.xlane.f32.xlu0 %v632
    %v660 = vpop.xlane.xlu0 %659
    %661 = vmax.xlane.f32.xlu0 %v633
    %v662 = vpop.xlane.xlu0 %661
    %663 = vmax.xlane.f32.xlu0 %v634
    %v664 = vpop.xlane.xlu0 %663
    %665 = vmax.xlane.f32.xlu0 %v635
    %v666 = vpop.xlane.xlu0 %665
    %667 = vmax.xlane.f32.xlu0 %v636
    %v668 = vpop.xlane.xlu0 %667
    %v669 = vsub.f32 %v621, %v638
    %v670 = vsub.f32 %v622, %v640
    %v671 = vsub.f32 %v623, %v642
    %v672 = vsub.f32 %v624, %v644
    %v673 = vsub.f32 %v625, %v646
    %v674 = vsub.f32 %v626, %v648
    %v675 = vsub.f32 %v627, %v650
    %v676 = vsub.f32 %v628, %v652
    %v677 = vsub.f32 %v629, %v654
    %v678 = vsub.f32 %v630, %v656
    %v679 = vsub.f32 %v631, %v658
    %v680 = vsub.f32 %v632, %v660
    %v681 = vsub.f32 %v633, %v662
    %v682 = vsub.f32 %v634, %v664
    %v683 = vsub.f32 %v635, %v666
    %v684 = vsub.f32 %v636, %v668
    %v685 = vmul.f32 %v669, 1.442695
    %v686 = vpow.pop %v685
    %v687 = vmul.f32 %v670, 1.442695
    %v688 = vpow.pop %v687
    %v689 = vmul.f32 %v671, 1.442695
    %v690 = vpow.pop %v689
    %v691 = vmul.f32 %v672, 1.442695
    %v692 = vpow.pop %v691
    %v693 = vmul.f32 %v673, 1.442695
    %v694 = vpow.pop %v693
    %v695 = vmul.f32 %v674, 1.442695
    %v696 = vpow.pop %v695
    %v697 = vmul.f32 %v675, 1.442695
    %v698 = vpow.pop %v697
    %v699 = vmul.f32 %v676, 1.442695
    %v700 = vpow.pop %v699
    %v701 = vmul.f32 %v677, 1.442695
    %v702 = vpow.pop %v701
    %v703 = vmul.f32 %v678, 1.442695
    %v704 = vpow.pop %v703
    %v705 = vmul.f32 %v679, 1.442695
    %v706 = vpow.pop %v705
    %v707 = vmul.f32 %v680, 1.442695
    %v708 = vpow.pop %v707
    %v709 = vmul.f32 %v681, 1.442695
    %v710 = vpow.pop %v709
    %v711 = vmul.f32 %v682, 1.442695
    %v712 = vpow.pop %v711
    %v713 = vmul.f32 %v683, 1.442695
    %v714 = vpow.pop %v713
    %v715 = vmul.f32 %v684, 1.442695
    %v716 = vpow.pop %v715
    %717 = vadd.xlane.f32.xlu0 %v686
    %v718 = vpop.xlane.xlu0 %717
    %719 = vadd.xlane.f32.xlu0 %v688
    %v720 = vpop.xlane.xlu0 %719
    %721 = vadd.xlane.f32.xlu0 %v690
    %v722 = vpop.xlane.xlu0 %721
    %723 = vadd.xlane.f32.xlu0 %v692
    %v724 = vpop.xlane.xlu0 %723
    %725 = vadd.xlane.f32.xlu0 %v694
    %v726 = vpop.xlane.xlu0 %725
    %727 = vadd.xlane.f32.xlu0 %v696
    %v728 = vpop.xlane.xlu0 %727
    %729 = vadd.xlane.f32.xlu0 %v698
    %v730 = vpop.xlane.xlu0 %729
    %731 = vadd.xlane.f32.xlu0 %v700
    %v732 = vpop.xlane.xlu0 %731
    %733 = vadd.xlane.f32.xlu0 %v702
    %v734 = vpop.xlane.xlu0 %733
    %735 = vadd.xlane.f32.xlu0 %v704
    %v736 = vpop.xlane.xlu0 %735
    %737 = vadd.xlane.f32.xlu0 %v706
    %v738 = vpop.xlane.xlu0 %737
    %739 = vadd.xlane.f32.xlu0 %v708
    %v740 = vpop.xlane.xlu0 %739
    %741 = vadd.xlane.f32.xlu0 %v710
    %v742 = vpop.xlane.xlu0 %741
    %743 = vadd.xlane.f32.xlu0 %v712
    %v744 = vpop.xlane.xlu0 %743
    %745 = vadd.xlane.f32.xlu0 %v714
    %v746 = vpop.xlane.xlu0 %745
    %747 = vadd.xlane.f32.xlu0 %v716
    %v748 = vpop.xlane.xlu0 %747
    %v749 = vlog2.pop %v718
    %v750 = vmul.f32 %v749, 0.6931472
    %v751 = vlog2.pop %v720
    %v752 = vmul.f32 %v751, 0.6931472
    %v753 = vlog2.pop %v722
    %v754 = vmul.f32 %v753, 0.6931472
    %v755 = vlog2.pop %v724
    %v756 = vmul.f32 %v755, 0.6931472
    %v757 = vlog2.pop %v726
    %v758 = vmul.f32 %v757, 0.6931472
    %v759 = vlog2.pop %v728
    %v760 = vmul.f32 %v759, 0.6931472
    %v761 = vlog2.pop %v730
    %v762 = vmul.f32 %v761, 0.6931472
    %v763 = vlog2.pop %v732
    %v764 = vmul.f32 %v763, 0.6931472
    %v765 = vlog2.pop %v734
    %v766 = vmul.f32 %v765, 0.6931472
    %v767 = vlog2.pop %v736
    %v768 = vmul.f32 %v767, 0.6931472
    %v769 = vlog2.pop %v738
    %v770 = vmul.f32 %v769, 0.6931472
    %v771 = vlog2.pop %v740
    %v772 = vmul.f32 %v771, 0.6931472
    %v773 = vlog2.pop %v742
    %v774 = vmul.f32 %v773, 0.6931472
    %v775 = vlog2.pop %v744
    %v776 = vmul.f32 %v775, 0.6931472
    %v777 = vlog2.pop %v746
    %v778 = vmul.f32 %v777, 0.6931472
    %v779 = vlog2.pop %v748
    %v780 = vmul.f32 %v779, 0.6931472
    %v781 = vadd.f32 %v638, %v750
    %v782 = vadd.f32 %v640, %v752
    %v783 = vadd.f32 %v642, %v754
    %v784 = vadd.f32 %v644, %v756
    %v785 = vadd.f32 %v646, %v758
    %v786 = vadd.f32 %v648, %v760
    %v787 = vadd.f32 %v650, %v762
    %v788 = vadd.f32 %v652, %v764
    %v789 = vadd.f32 %v654, %v766
    %v790 = vadd.f32 %v656, %v768
    %v791 = vadd.f32 %v658, %v770
    %v792 = vadd.f32 %v660, %v772
    %v793 = vadd.f32 %v662, %v774
    %v794 = vadd.f32 %v664, %v776
    %v795 = vadd.f32 %v666, %v778
    %v796 = vadd.f32 %v668, %v780
    %v797 = vsub.f32 %v535, %v781
    %v798 = vsub.f32 %v540, %v782
    %v799 = vsub.f32 %v545, %v783
    %v800 = vsub.f32 %v550, %v784
    %v801 = vsub.f32 %v555, %v785
    %v802 = vsub.f32 %v560, %v786
    %v803 = vsub.f32 %v565, %v787
    %v804 = vsub.f32 %v570, %v788
    %v805 = vsub.f32 %v575, %v789
    %v806 = vsub.f32 %v580, %v790
    %v807 = vsub.f32 %v585, %v791
    %v808 = vsub.f32 %v590, %v792
    %v809 = vsub.f32 %v595, %v793
    %v810 = vsub.f32 %v600, %v794
    %v811 = vsub.f32 %v605, %v795
    %v812 = vsub.f32 %v610, %v796
    %v813 = vsel %vm620, %v797, %v535
    %v814 = vsel %vm620, %v798, %v540
    %v815 = vsel %vm620, %v799, %v545
    %v816 = vsel %vm620, %v800, %v550
    %v817 = vsel %vm620, %v801, %v555
    %v818 = vsel %vm620, %v802, %v560
    %v819 = vsel %vm620, %v803, %v565
    %v820 = vsel %vm620, %v804, %v570
    %v821 = vsel %vm620, %v805, %v575
    %v822 = vsel %vm620, %v806, %v580
    %v823 = vsel %vm620, %v807, %v585
    %v824 = vsel %vm620, %v808, %v590
    %v825 = vsel %vm620, %v809, %v595
    %v826 = vsel %vm620, %v810, %v600
    %v827 = vsel %vm620, %v811, %v605
    %v828 = vsel %vm620, %v812, %v610
    %829 = vxpose.xlu0.b32.start [1/16] %v813, 128
    %830 = vxpose.xlu0.b32.cont [2/16] %v814, 128
    %831 = vxpose.xlu0.b32.cont [3/16] %v815, 128
    %832 = vxpose.xlu0.b32.cont [4/16] %v816, 128
    %833 = vxpose.xlu0.b32.cont [5/16] %v817, 128
    %834 = vxpose.xlu0.b32.cont [6/16] %v818, 128
    %835 = vxpose.xlu0.b32.cont [7/16] %v819, 128
    %836 = vxpose.xlu0.b32.cont [8/16] %v820, 128
    %837 = vxpose.xlu0.b32.cont [9/16] %v821, 128
    %838 = vxpose.xlu0.b32.cont [10/16] %v822, 128
    %839 = vxpose.xlu0.b32.cont [11/16] %v823, 128
    %840 = vxpose.xlu0.b32.cont [12/16] %v824, 128
    %841 = vxpose.xlu0.b32.cont [13/16] %v825, 128
    %842 = vxpose.xlu0.b32.cont [14/16] %v826, 128
    %843 = vxpose.xlu0.b32.cont [15/16] %v827, 128
    %844 = vxpose.xlu0.b32.end [16/16] %v828, 128
    %v845 = vpop.trf.xlu0
    %v846 = vpop.trf.xlu0
    %v847 = vpop.trf.xlu0
    %v848 = vpop.trf.xlu0
    %v849 = vpop.trf.xlu0
    %v850 = vpop.trf.xlu0
    %v851 = vpop.trf.xlu0
    %v852 = vpop.trf.xlu0
    %v853 = vpop.trf.xlu0
    %v854 = vpop.trf.xlu0
    %v855 = vpop.trf.xlu0
    %v856 = vpop.trf.xlu0
    %v857 = vpop.trf.xlu0
    %v858 = vpop.trf.xlu0
    %v859 = vpop.trf.xlu0
    %v860 = vpop.trf.xlu0
    %861 = vst [vmem:[%s4] sm:$0xff] %v845
    %862 = vst [vmem:[%s4 + $0x8] sm:$0xff] %v846
    // Predicated region
    $region22: #{actor_critic_forward.1} parent=1 // pred_check
      _
    $region23: #{actor_critic_forward.1} parent=1 // pred_check_branch
      %864 = sbr.rel (0) target = $region25
    $region24: #{actor_critic_forward.1} parent=1 // pred_region
      _
    $region25: #{actor_critic_forward.1} parent=1 // pred_fallthru
      _
    // Predicated region
    $region26: #{actor_critic_forward.1} parent=1 // pred_check
      _
    $region27: #{actor_critic_forward.1} parent=1 // pred_check_branch
      %866 = sbr.rel (0) target = $region29
    $region28: #{actor_critic_forward.1} parent=1 // pred_region
      _
    $region29: #{actor_critic_forward.1} parent=1 // pred_fallthru
      _
    %867 = vsyncpa [#allocation3], 1

</llo_original>
